<compile_context>
chip_gen: v7x
topology: tpu7x:2x2x1
jax: 0.10.0
libtpu: 0.0.40
codegen_flags: <defaults>
</compile_context>

<pallas_src>
import functools

import jax
import jax.numpy as jnp
from jax.experimental import pallas as pl
from jax.experimental.pallas import tpu as pltpu

GAMMA = 2.0
_LANES = 1024        # lane-dense tile width (multiple of 128)
_TS_MAX = 128        # max sublane rows per tile (~1.6 MiB f32 per input tile)
_NCORES = 2          # leading "parallel" grid axis (megacore on v7x)


def _round_up(v, m):
    return ((v + m - 1) // m) * m


def _focal_kernel(x_ref, t_ref, alpha_ref, out_ref, acc_ref, *, n_classes, inv_n):
    s = pl.program_id(1)              # reduction ("arbitrary") axis

    @pl.when(s == 0)
    def _init():
        for c in range(n_classes):
            acc_ref[c] = jnp.float32(0.0)

    x = x_ref[...].astype(jnp.float32)   # [C, TS, L] logits
    t = t_ref[...].astype(jnp.float32)   # [C, TS, L] targets

    # Numerically stable BCE-with-logits; e = exp(-|x|) hoisted -> issued once.
    e = jnp.exp(-jnp.abs(x))
    bce = jnp.maximum(x, 0.0) - x * t + jnp.log1p(e)
    pt = jnp.exp(-bce)
    one_m_pt = 1.0 - pt
    g = (one_m_pt * one_m_pt) * bce      # gamma == 2 -> explicit square (VPU, no pow)

    # Per-class partial sums into the f32 SMEM accumulator (alpha applied later).
    for c in range(n_classes):
        acc_ref[c] = acc_ref[c] + jnp.sum(g[c])

    @pl.when(s == pl.num_programs(1) - 1)
    def _finalize():
        total = jnp.float32(0.0)
        for c in range(n_classes):
            total = total + alpha_ref[c] * acc_ref[c]
        # This core's contribution to the mean; the wrapper sums per-core partials.
        out_ref[...] = jnp.full(out_ref.shape, total * inv_n, dtype=jnp.float32)


def focal_loss(inputs, targets, alpha, gamma=2.0, reduction="mean"):
    """Pallas-backed focal loss. inputs/targets: [B, N, C]; alpha: [C]."""
    assert gamma == GAMMA, "gamma baked to 2.0 (explicit square) in the kernel"
    assert reduction == "mean"
    B, N, C = inputs.shape
    M = B * N
    n_elems = B * N * C

    # Lane-dense tiling: per class, tokens become [S, _LANES] rows; S is padded
    # to a multiple of (_NCORES * ts) so the 2-D grid divides evenly.
    s_need = -(-M // _LANES)
    ts = min(_TS_MAX, _round_up(max(1, -(-s_need // _NCORES)), 8))
    s_pad = _round_up(max(s_need, 1), _NCORES * ts)
    spc = s_pad // (_NCORES * ts)        # tiles per core along the reduction axis
    m_pad = s_pad * _LANES

    def to_slab(a, pad_val):
        a2 = jnp.transpose(a, (2, 0, 1)).reshape(C, M)
        a2 = jnp.pad(a2, ((0, 0), (0, m_pad - M)), constant_values=pad_val)
        return a2.reshape(C, s_pad, _LANES)

    # Padding with (logit=+40, target=1) contributes exactly 0 focal loss in f32.
    x_slab = to_slab(inputs, 40.0)
    t_slab = to_slab(targets, 1.0)
    alpha_sc = alpha.astype(jnp.float32).reshape(C)

    kernel = functools.partial(_focal_kernel, n_classes=C, inv_n=1.0 / n_elems)

    partials = pl.pallas_call(
        kernel,
        out_shape=jax.ShapeDtypeStruct((_NCORES, 8, 128), jnp.float32),
        grid_spec=pltpu.PrefetchScalarGridSpec(
            num_scalar_prefetch=0,
            grid=(_NCORES, spc),
            in_specs=[
                pl.BlockSpec((C, ts, _LANES), lambda c, s: (0, c * spc + s, 0)),
                pl.BlockSpec((C, ts, _LANES), lambda c, s: (0, c * spc + s, 0)),
                pl.BlockSpec(memory_space=pltpu.SMEM),     # alpha -> SMEM scalars
            ],
            out_specs=pl.BlockSpec((1, 8, 128), lambda c, s: (c, 0, 0)),
            scratch_shapes=[pltpu.SMEM((C,), jnp.float32)],
        ),
        compiler_params=pltpu.CompilerParams(
            dimension_semantics=("parallel", "arbitrary"),
            vmem_limit_bytes=32 * 1024 * 1024,
        ),
    )(x_slab, t_slab, alpha_sc)

    return jnp.sum(partials[:, 0, 0])


def focal_loss_ref(inputs, targets, alpha, gamma=2.0):
    x = inputs.astype(jnp.float32)
    t = targets.astype(jnp.float32)
    bce = jnp.maximum(x, 0.0) - x * t + jnp.log1p(jnp.exp(-jnp.abs(x)))
    pt = jnp.exp(-bce)
    f = alpha.reshape(1, 1, -1).astype(jnp.float32) * (1.0 - pt) ** gamma * bce
    return jnp.mean(f)


if __name__ == "__main__":
    key = jax.random.PRNGKey(0)
    k1, k2 = jax.random.split(key)

    B, N, C = 2, 16, 3  # class axis last, matching alpha length 3 (module default)
    inputs = jax.random.normal(k1, (B, N, C), dtype=jnp.float32)              # logits
    targets = jax.random.bernoulli(k2, 0.5, (B, N, C)).astype(jnp.float32)    # {0,1}

    # Default alpha from the module.
    alpha_default = jnp.array([1.0, 1.0, 1.0], dtype=jnp.float32)
    loss = jax.block_until_ready(focal_loss(inputs, targets, alpha_default))
    ref = focal_loss_ref(inputs, targets, alpha_default)
    assert jnp.allclose(loss, ref, rtol=1e-5, atol=1e-6), (loss, ref)

    # Non-uniform alpha to exercise the per-class scaling path.
    alpha_nu = jnp.array([0.25, 1.0, 2.0], dtype=jnp.float32)
    loss_nu = jax.block_until_ready(focal_loss(inputs, targets, alpha_nu))
    ref_nu = focal_loss_ref(inputs, targets, alpha_nu)
    assert jnp.allclose(loss_nu, ref_nu, rtol=1e-5, atol=1e-6), (loss_nu, ref_nu)

    print("KERNEL_OK")
</pallas_src>

<mosaic_0001>
module attributes {stable_mosaic.version = 11 : i64} {
  func.func @_focal_kernel(%arg0: i32, %arg1: i32, %arg2: memref<3x8x1024xf32, #tpu.memory_space<vmem>>, %arg3: memref<3x8x1024xf32, #tpu.memory_space<vmem>>, %arg4: memref<3xf32, #tpu.memory_space<smem>>, %arg5: memref<1x8x128xf32, #tpu.memory_space<vmem>>, %arg6: memref<3xf32, #tpu.memory_space<smem>>) attributes {dimension_semantics = [#tpu.dimension_semantics<parallel>, #tpu.dimension_semantics<arbitrary>], iteration_bounds = array<i64: 2, 1>, scalar_prefetch = 0 : i64, scratch_operands = 1 : i64, tpu.core_type = #tpu.core_type<tc>, window_params = [{transform_indices = @transform_0, window_bounds = array<i64: 3, 8, 1024>}, {transform_indices = @transform_1, window_bounds = array<i64: 3, 8, 1024>}, {transform_indices = @transform_2, window_bounds = array<i64: 3>}, {transform_indices = @transform_3, window_bounds = array<i64: 1, 8, 128>}]} {
    %c0_i32 = arith.constant 0 : i32
    %0 = arith.cmpi eq, %arg1, %c0_i32 : i32
    %1 = arith.extui %0 : i1 to i32
    %c0_i32_0 = arith.constant 0 : i32
    %2 = arith.cmpi ne, %1, %c0_i32_0 : i32
    scf.if %2 {
      %cst_18 = arith.constant 0.000000e+00 : f32
      %c0_19 = arith.constant 0 : index
      %52 = memref.load %arg6[%c0_19] : memref<3xf32, #tpu.memory_space<smem>>
      memref.store %cst_18, %arg6[%c0_19] : memref<3xf32, #tpu.memory_space<smem>>
      %cst_20 = arith.constant 0.000000e+00 : f32
      %c1_21 = arith.constant 1 : index
      %53 = memref.load %arg6[%c1_21] : memref<3xf32, #tpu.memory_space<smem>>
      memref.store %cst_20, %arg6[%c1_21] : memref<3xf32, #tpu.memory_space<smem>>
      %cst_22 = arith.constant 0.000000e+00 : f32
      %c2_23 = arith.constant 2 : index
      %54 = memref.load %arg6[%c2_23] : memref<3xf32, #tpu.memory_space<smem>>
      memref.store %cst_22, %arg6[%c2_23] : memref<3xf32, #tpu.memory_space<smem>>
    } else {
    }
    %c0 = arith.constant 0 : index
    %c0_1 = arith.constant 0 : index
    %c0_2 = arith.constant 0 : index
    %3 = vector.load %arg2[%c0, %c0_1, %c0_2] : memref<3x8x1024xf32, #tpu.memory_space<vmem>>, vector<3x8x1024xf32>
    %c0_3 = arith.constant 0 : index
    %c0_4 = arith.constant 0 : index
    %c0_5 = arith.constant 0 : index
    %4 = vector.load %arg3[%c0_3, %c0_4, %c0_5] : memref<3x8x1024xf32, #tpu.memory_space<vmem>>, vector<3x8x1024xf32>
    %5 = math.absf %3 : vector<3x8x1024xf32>
    %cst = arith.constant 0.000000e+00 : f32
    %6 = vector.broadcast %cst : f32 to vector<3x8x1024xf32>
    %7 = arith.subf %6, %5 : vector<3x8x1024xf32>
    %8 = math.exp %7 : vector<3x8x1024xf32>
    %cst_6 = arith.constant 0.000000e+00 : f32
    %9 = vector.broadcast %cst_6 : f32 to vector<3x8x1024xf32>
    %10 = arith.maximumf %3, %9 : vector<3x8x1024xf32>
    %11 = arith.mulf %3, %4 : vector<3x8x1024xf32>
    %12 = arith.subf %10, %11 : vector<3x8x1024xf32>
    %13 = math.log1p %8 : vector<3x8x1024xf32>
    %14 = arith.addf %12, %13 : vector<3x8x1024xf32>
    %cst_7 = arith.constant 0.000000e+00 : f32
    %15 = vector.broadcast %cst_7 : f32 to vector<3x8x1024xf32>
    %16 = arith.subf %15, %14 : vector<3x8x1024xf32>
    %17 = math.exp %16 : vector<3x8x1024xf32>
    %cst_8 = arith.constant 1.000000e+00 : f32
    %18 = vector.broadcast %cst_8 : f32 to vector<3x8x1024xf32>
    %19 = arith.subf %18, %17 : vector<3x8x1024xf32>
    %20 = arith.mulf %19, %19 : vector<3x8x1024xf32>
    %21 = arith.mulf %20, %14 : vector<3x8x1024xf32>
    %c0_9 = arith.constant 0 : index
    %22 = memref.load %arg6[%c0_9] : memref<3xf32, #tpu.memory_space<smem>>
    %23 = vector.extract_strided_slice %21 {offsets = [0, 0, 0], sizes = [1, 8, 1024], strides = [1, 1, 1]} : vector<3x8x1024xf32> to vector<1x8x1024xf32>
    %24 = vector.shape_cast %23 : vector<1x8x1024xf32> to vector<8x1024xf32>
    %25 = vector.shape_cast %24 : vector<8x1024xf32> to vector<1x8x1024xf32>
    %cst_10 = arith.constant dense<0.000000e+00> : vector<1xf32>
    %26 = vector.multi_reduction <add>, %25, %cst_10 [1, 2] : vector<1x8x1024xf32> to vector<1xf32>
    %27 = vector.shape_cast %26 : vector<1xf32> to vector<1x1x1xf32>
    %28 = vector.extract %27[0, 0, 0] : f32 from vector<1x1x1xf32>
    %29 = arith.addf %22, %28 : f32
    %c0_11 = arith.constant 0 : index
    %30 = memref.load %arg6[%c0_11] : memref<3xf32, #tpu.memory_space<smem>>
    memref.store %29, %arg6[%c0_11] : memref<3xf32, #tpu.memory_space<smem>>
    %c1 = arith.constant 1 : index
    %31 = memref.load %arg6[%c1] : memref<3xf32, #tpu.memory_space<smem>>
    %32 = vector.extract_strided_slice %21 {offsets = [1, 0, 0], sizes = [1, 8, 1024], strides = [1, 1, 1]} : vector<3x8x1024xf32> to vector<1x8x1024xf32>
    %33 = vector.shape_cast %32 : vector<1x8x1024xf32> to vector<8x1024xf32>
    %34 = vector.shape_cast %33 : vector<8x1024xf32> to vector<1x8x1024xf32>
    %cst_12 = arith.constant dense<0.000000e+00> : vector<1xf32>
    %35 = vector.multi_reduction <add>, %34, %cst_12 [1, 2] : vector<1x8x1024xf32> to vector<1xf32>
    %36 = vector.shape_cast %35 : vector<1xf32> to vector<1x1x1xf32>
    %37 = vector.extract %36[0, 0, 0] : f32 from vector<1x1x1xf32>
    %38 = arith.addf %31, %37 : f32
    %c1_13 = arith.constant 1 : index
    %39 = memref.load %arg6[%c1_13] : memref<3xf32, #tpu.memory_space<smem>>
    memref.store %38, %arg6[%c1_13] : memref<3xf32, #tpu.memory_space<smem>>
    %c2 = arith.constant 2 : index
    %40 = memref.load %arg6[%c2] : memref<3xf32, #tpu.memory_space<smem>>
    %41 = vector.extract_strided_slice %21 {offsets = [2, 0, 0], sizes = [1, 8, 1024], strides = [1, 1, 1]} : vector<3x8x1024xf32> to vector<1x8x1024xf32>
    %42 = vector.shape_cast %41 : vector<1x8x1024xf32> to vector<8x1024xf32>
    %43 = vector.shape_cast %42 : vector<8x1024xf32> to vector<1x8x1024xf32>
    %cst_14 = arith.constant dense<0.000000e+00> : vector<1xf32>
    %44 = vector.multi_reduction <add>, %43, %cst_14 [1, 2] : vector<1x8x1024xf32> to vector<1xf32>
    %45 = vector.shape_cast %44 : vector<1xf32> to vector<1x1x1xf32>
    %46 = vector.extract %45[0, 0, 0] : f32 from vector<1x1x1xf32>
    %47 = arith.addf %40, %46 : f32
    %c2_15 = arith.constant 2 : index
    %48 = memref.load %arg6[%c2_15] : memref<3xf32, #tpu.memory_space<smem>>
    memref.store %47, %arg6[%c2_15] : memref<3xf32, #tpu.memory_space<smem>>
    %c0_i32_16 = arith.constant 0 : i32
    %49 = arith.cmpi eq, %arg1, %c0_i32_16 : i32
    %50 = arith.extui %49 : i1 to i32
    %c0_i32_17 = arith.constant 0 : i32
    %51 = arith.cmpi ne, %50, %c0_i32_17 : i32
    scf.if %51 {
      %c0_18 = arith.constant 0 : index
      %52 = memref.load %arg4[%c0_18] : memref<3xf32, #tpu.memory_space<smem>>
      %c0_19 = arith.constant 0 : index
      %53 = memref.load %arg6[%c0_19] : memref<3xf32, #tpu.memory_space<smem>>
      %54 = arith.mulf %52, %53 : f32
      %cst_20 = arith.constant 0.000000e+00 : f32
      %55 = arith.addf %cst_20, %54 : f32
      %c1_21 = arith.constant 1 : index
      %56 = memref.load %arg4[%c1_21] : memref<3xf32, #tpu.memory_space<smem>>
      %c1_22 = arith.constant 1 : index
      %57 = memref.load %arg6[%c1_22] : memref<3xf32, #tpu.memory_space<smem>>
      %58 = arith.mulf %56, %57 : f32
      %59 = arith.addf %55, %58 : f32
      %c2_23 = arith.constant 2 : index
      %60 = memref.load %arg4[%c2_23] : memref<3xf32, #tpu.memory_space<smem>>
      %c2_24 = arith.constant 2 : index
      %61 = memref.load %arg6[%c2_24] : memref<3xf32, #tpu.memory_space<smem>>
      %62 = arith.mulf %60, %61 : f32
      %63 = arith.addf %59, %62 : f32
      %cst_25 = arith.constant 0.010416667 : f32
      %64 = arith.mulf %63, %cst_25 : f32
      %65 = vector.broadcast %64 : f32 to vector<1x8x128xf32>
      %c0_26 = arith.constant 0 : index
      %c0_27 = arith.constant 0 : index
      %c0_28 = arith.constant 0 : index
      %66 = vector.load %arg5[%c0_26, %c0_27, %c0_28] : memref<1x8x128xf32, #tpu.memory_space<vmem>>, vector<1x8x128xf32>
      tpu.vector_store %arg5[%c0_26, %c0_27, %c0_28], %65 {strides = array<i32>} : memref<1x8x128xf32, #tpu.memory_space<vmem>>, vector<1x8x128xf32>,
    } else {
    }
    return
  }
  func.func @transform_0(%arg0: i32, %arg1: i32) -> (i32, i32, i32) {
    %c1_i32 = arith.constant 1 : i32
    %0 = arith.muli %arg0, %c1_i32 : i32
    %1 = arith.addi %0, %arg1 : i32
    %c0_i32 = arith.constant 0 : i32
    %c0_i32_0 = arith.constant 0 : i32
    %c0_i32_1 = arith.constant 0 : i32
    return %c0_i32, %1, %c0_i32_0 : i32, i32, i32
  }
  func.func @transform_1(%arg0: i32, %arg1: i32) -> (i32, i32, i32) {
    %c1_i32 = arith.constant 1 : i32
    %0 = arith.muli %arg0, %c1_i32 : i32
    %1 = arith.addi %0, %arg1 : i32
    %c0_i32 = arith.constant 0 : i32
    %c0_i32_0 = arith.constant 0 : i32
    %c0_i32_1 = arith.constant 0 : i32
    return %c0_i32, %1, %c0_i32_0 : i32, i32, i32
  }
  func.func @transform_2(%arg0: i32, %arg1: i32) -> i32 {
    %c0_i32 = arith.constant 0 : i32
    %c0_i32_0 = arith.constant 0 : i32
    return %c0_i32 : i32
  }
  func.func @transform_3(%arg0: i32, %arg1: i32) -> (i32, i32, i32) {
    %c0_i32 = arith.constant 0 : i32
    %c0_i32_0 = arith.constant 0 : i32
    %c0_i32_1 = arith.constant 0 : i32
    return %arg0, %c0_i32, %c0_i32_0 : i32, i32, i32
  }
}

</mosaic_0001>

<llo_original>
// kernel: tpu_custom_call.1
$region0: #{tpu_custom_call.1}
  #allocation0 [shape = 'u32[]', space=smem, size = 0x4, offset = 0x4, fixed_abs, tag = 'smem constant byte address 0x4 - core index']
  #allocation1 [shape = 'u32[144,128]{1,0:T(1,128)}', space=vmem, size = 0x12000, scoped, tag = 'internal scratch']
  #allocation2 [shape = 'f32[3]{0:T(128)}', space=smem, size = 0x200, scoped, tag = 'scratch operand']
  %s0 = inlined_call_operand.hbm [shape: f32[3,16,1024], index: 0, kind: input, shape index: {}]
  %s1 = inlined_call_operand.hbm [shape: f32[3,16,1024], index: 1, kind: input, shape index: {}]
  %s2 = inlined_call_operand.vmem [shape: f32[3], index: 2, kind: input, shape index: {}]
  %s3 = inlined_call_operand.hbm [shape: f32[2,8,128], index: 3, kind: output, shape index: {}]
  %s4 = sld [smem:[#allocation0]]
  $region65: #{tpu_custom_call.1} parent=0
    _
  %s6 = ssub.s32 1, %s4
  %s7 = scalar_select 0, %s6, %s4
  $region1: #{tpu_custom_call.1} parent=0
    #allocation3 [shape = 'u8[196608]{0}', space=vmem, size = 0x30000, scoped, tag = 'input window, operand 0']
    #allocation4 [shape = 's32[2]{0}', space=sflag, size = 0x8, scoped, tag = 'scoped memory for tpu_custom_call.1']
    #allocation5 [shape = 's32[2]{0}', space=sflag, size = 0x8, scoped, tag = 'scoped memory for tpu_custom_call.1']
    #allocation6 [shape = 's32[2]{0}', space=sflag, size = 0x8, scoped, tag = 'scoped memory for tpu_custom_call.1']
    #allocation7 [shape = 'u8[196608]{0}', space=vmem, size = 0x30000, scoped, tag = 'input window, operand 1']
    #allocation8 [shape = 's32[2]{0}', space=sflag, size = 0x8, scoped, tag = 'scoped memory for tpu_custom_call.1']
    #allocation9 [shape = 'u8[512]{0}', space=smem, size = 0x200, scoped, tag = 'input window, operand 2, single buffered']
    #allocation10 [shape = 'u8[8192]{0}', space=vmem, size = 0x2000, scoped, tag = 'output window, operand 0']
    %8 = vsyncpa [#allocation4], 0
    %s9 = scalar_lea.sflag [#allocation4], 1
    %10 = vsyncpa %s9, 0
    %11 = vsyncpa [#allocation8], 0
    %s12 = scalar_lea.sflag [#allocation8], 1
    %13 = vsyncpa %s12, 0
    %14 = vsyncpa [#allocation6], 0
    %15 = vsyncpa [#allocation5], 0
    %s16 = scalar_lea.sflag [#allocation5], 1
    %17 = vsyncpa %s16, 0
    loop: start=0, step=1, limit=4
    $region2: #{tpu_custom_call.1} parent=1 // loop_pre_header
      _
    $region3: #{tpu_custom_call.1} parent=1 // loop_header
      %s19 = sphi 0, %s23
      %p20 = scmp.ge.s32.totalorder %s19, 4
      %s26 = sphi 0, %s38
      %s27 = sphi 0, %s34
      %s28 = sphi 0, %s26
      %s29 = sphi 0, %s27
      %s30 = sphi 0, %s28
      %s31 = sphi 0, %s29
      %s43 = sphi 0, %s45
      %s46 = sphi 0, %s43
      %s47 = sphi 0, %s46
      %s63 = sphi 0, %s47
      %s71 = sphi 0, %s73
      %s74 = sphi 0, %s71
      %s75 = sphi 0, %s74
      %s91 = sphi 0, %s75
      %s95 = sphi 0, %s95
      %s97 = sphi 0, %s95
      %s98 = sphi 0, %s97
      %s112 = sphi 0, %s98
      %s118 = sphi 0, %s120
      %s121 = sphi 0, %s118
      %s122 = sphi 0, %s121
      %s138 = sphi 0, %s122
    $region4: #{tpu_custom_call.1} parent=1 // loop_header_branch
      %22 = sbr.rel (%p20) target = $region8
    $region5: #{tpu_custom_call.1} parent=1 // loop_body
      %s24 = ssub.s32 %s19, 1
      %s25 = ssub.s32 %s19, 2
      %s32 = sadd.s32 1, %s27
      %p33 = scmp.ge.s32.totalorder %s32, 1
      %s34 = scalar_select %p33, 0, %s32
      %s35 = sadd.s32 1, %s26
      %s36 = scalar_select %p33, %s35, %s26
      %p37 = scmp.ge.s32.totalorder %s36, 2
      %s38 = scalar_select %p37, 0, %s36
      %s39 = sadd.s32 %s26, %s27
      %s40 = sadd.s32 %s38, %s34
      %s41 = ssub.s32 %s39, %s40
      %p42 = scmp.eq.s32.totalorder %s41, 0
      %s44 = sadd.s32 %s43, 1
      %s45 = scalar_select %p42, %s43, %s44
      %p48 = pneg %p42
      %p49 = scmp.eq.s32.totalorder %s19, 1
      %p50 = por %p48, %p49
      %p51 = scmp.ne.s32.totalorder %s43, %s46
      %p52 = scmp.eq.s32.totalorder %s19, 0
      %p53 = por %p51, %p52
      %p54 = scmp.ne.s32.totalorder %s43, %s46
      %p55 = scmp.eq.s32.totalorder %s24, 1
      %p56 = por %p54, %p55
      %p57 = scmp.ne.s32.totalorder %s46, %s47
      %p58 = scmp.eq.s32.totalorder %s24, 0
      %p59 = por %p57, %p58
      %p60 = scmp.ne.s32.totalorder %s46, %s47
      %p61 = scmp.eq.s32.totalorder %s25, 1
      %p62 = por %p60, %p61
      %p64 = scmp.ne.s32.totalorder %s47, %s63
      %p65 = scmp.eq.s32.totalorder %s25, 0
      %p66 = por %p64, %p65
      %s67 = sadd.s32 %s26, %s27
      %s68 = sadd.s32 %s38, %s34
      %s69 = ssub.s32 %s67, %s68
      %p70 = scmp.eq.s32.totalorder %s69, 0
      %s72 = sadd.s32 %s71, 1
      %s73 = scalar_select %p70, %s71, %s72
      %p76 = pneg %p70
      %p77 = scmp.eq.s32.totalorder %s19, 1
      %p78 = por %p76, %p77
      %p79 = scmp.ne.s32.totalorder %s71, %s74
      %p80 = scmp.eq.s32.totalorder %s19, 0
      %p81 = por %p79, %p80
      %p82 = scmp.ne.s32.totalorder %s71, %s74
      %p83 = scmp.eq.s32.totalorder %s24, 1
      %p84 = por %p82, %p83
      %p85 = scmp.ne.s32.totalorder %s74, %s75
      %p86 = scmp.eq.s32.totalorder %s24, 0
      %p87 = por %p85, %p86
      %p88 = scmp.ne.s32.totalorder %s74, %s75
      %p89 = scmp.eq.s32.totalorder %s25, 1
      %p90 = por %p88, %p89
      %p92 = scmp.ne.s32.totalorder %s75, %s91
      %p93 = scmp.eq.s32.totalorder %s25, 0
      %p94 = por %p92, %p93
      %s96 = sadd.s32 %s95, 1
      %p99 = scmp.eq.s32.totalorder %s19, 1
      %p100 = scmp.ne.s32.totalorder %s95, %s97
      %p101 = scmp.eq.s32.totalorder %s19, 0
      %p102 = por %p100, %p101
      %p103 = scmp.ne.s32.totalorder %s95, %s97
      %p104 = scmp.eq.s32.totalorder %s24, 1
      %p105 = por %p103, %p104
      %p106 = scmp.ne.s32.totalorder %s97, %s98
      %p107 = scmp.eq.s32.totalorder %s24, 0
      %p108 = por %p106, %p107
      %p109 = scmp.ne.s32.totalorder %s97, %s98
      %p110 = scmp.eq.s32.totalorder %s25, 1
      %p111 = por %p109, %p110
      %p113 = scmp.ne.s32.totalorder %s98, %s112
      %p114 = scmp.eq.s32.totalorder %s25, 0
      %p115 = por %p113, %p114
      %s116 = ssub.s32 %s26, %s38
      %p117 = scmp.eq.s32.totalorder %s116, 0
      %s119 = sadd.s32 %s118, 1
      %s120 = scalar_select %p117, %s118, %s119
      %p123 = pneg %p117
      %p124 = scmp.eq.s32.totalorder %s19, 1
      %p125 = por %p123, %p124
      %p126 = scmp.ne.s32.totalorder %s118, %s121
      %p127 = scmp.eq.s32.totalorder %s19, 0
      %p128 = por %p126, %p127
      %p129 = scmp.ne.s32.totalorder %s118, %s121
      %p130 = scmp.eq.s32.totalorder %s24, 1
      %p131 = por %p129, %p130
      %p132 = scmp.ne.s32.totalorder %s121, %s122
      %p133 = scmp.eq.s32.totalorder %s24, 0
      %p134 = por %p132, %p133
      %p135 = scmp.ne.s32.totalorder %s121, %s122
      %p136 = scmp.eq.s32.totalorder %s25, 1
      %p137 = por %p135, %p136
      %p139 = scmp.ne.s32.totalorder %s122, %s138
      %p140 = scmp.eq.s32.totalorder %s25, 0
      %p141 = por %p139, %p140
      %p142 = scmp.le.s32.totalorder 1, %s19
      %p143 = scmp.lt.s32.totalorder %s19, 3
      %p144 = pnand %p142, %p143
      %p145 = pneg %p144
      // Predicated region
      $region9: #{tpu_custom_call.1} parent=5 // pred_check
        _
      $region10: #{tpu_custom_call.1} parent=5 // pred_check_branch
        %147 = sbr.rel (%p144) target = $region12
      $region11: #{tpu_custom_call.1} parent=5 // pred_region
        %s148 = ssub.s32 %s19, 1
        // Predicated region
        $region13: #{tpu_custom_call.1} parent=11 // pred_check
          %p149 = pneg %p108
        $region14: #{tpu_custom_call.1} parent=11 // pred_check_branch
          %151 = sbr.rel (%p149) target = $region16
        $region15: #{tpu_custom_call.1} parent=11 // pred_region
          %s153 = ssub.s32 16, 16
          %154 = vsyncadd [#allocation6], %s153
          %s156 = sshll.u32 %s2, 4
          %s157 = int_to_ptr.vmem [resolvable:$true] %s156
          %159 = dma.vmem_to_smem %s157, 16, [#allocation9], [#allocation6]
        $region16: #{tpu_custom_call.1} parent=11 // pred_fallthru
          _
      $region12: #{tpu_custom_call.1} parent=5 // pred_fallthru
        _
      %p160 = scmp.lt.s32.totalorder %s19, 2
      // Predicated region
      $region17: #{tpu_custom_call.1} parent=5 // pred_check
        %p161 = pneg %p160
      $region18: #{tpu_custom_call.1} parent=5 // pred_check_branch
        %163 = sbr.rel (%p161) target = $region20
      $region19: #{tpu_custom_call.1} parent=5 // pred_region
        // Predicated region
        $region21: #{tpu_custom_call.1} parent=19 // pred_check
          %p164 = pneg %p53
        $region22: #{tpu_custom_call.1} parent=19 // pred_check_branch
          %166 = sbr.rel (%p164) target = $region24
        $region23: #{tpu_custom_call.1} parent=19 // pred_region
          %s167 = sand.u32 %s43, 1
          %s168 = scalar_lea.sflag [#allocation4], %s167
          %s169 = sand.u32 %s43, 1
          %s170 = smul.addr %s169, 192
          %s171 = scalar_lea.vmem [#allocation3], %s170
          %s172 = sadd.s32 %s26, %s27
          %s174 = ssub.s32 3072, 3072
          %175 = vsyncadd %s168, %s174
          %s176 = smul.addr %s172, 8
          %s177 = smul.addr %s176, 128
          %s178 = scalar_lea.hbm %s0, %s177
          %s179 = sshll.u32 %s171, 4
          %s180 = int_to_ptr.vmem [resolvable:$true] %s179
          %185 = dma.hbm_to_vmem [thread:$0]  %s178, 3072, %s180, %s168, 2048, 1024, 64
        $region24: #{tpu_custom_call.1} parent=19 // pred_fallthru
          _
        // Predicated region
        $region25: #{tpu_custom_call.1} parent=19 // pred_check
          %p186 = pneg %p81
        $region26: #{tpu_custom_call.1} parent=19 // pred_check_branch
          %188 = sbr.rel (%p186) target = $region28
        $region27: #{tpu_custom_call.1} parent=19 // pred_region
          %s189 = sand.u32 %s71, 1
          %s190 = scalar_lea.sflag [#allocation8], %s189
          %s191 = sand.u32 %s71, 1
          %s192 = smul.addr %s191, 192
          %s193 = scalar_lea.vmem [#allocation7], %s192
          %s194 = sadd.s32 %s26, %s27
          %s196 = ssub.s32 3072, 3072
          %197 = vsyncadd %s190, %s196
          %s198 = smul.addr %s194, 8
          %s199 = smul.addr %s198, 128
          %s200 = scalar_lea.hbm %s1, %s199
          %s201 = sshll.u32 %s193, 4
          %s202 = int_to_ptr.vmem [resolvable:$true] %s201
          %207 = dma.hbm_to_vmem [thread:$0]  %s200, 3072, %s202, %s190, 2048, 1024, 64
        $region28: #{tpu_custom_call.1} parent=19 // pred_fallthru
          _
      $region20: #{tpu_custom_call.1} parent=5 // pred_fallthru
        _
      %p208 = scmp.le.s32.totalorder 1, %s19
      %p209 = scmp.lt.s32.totalorder %s19, 3
      %p210 = pnand %p208, %p209
      %p211 = pneg %p210
      // Predicated region
      $region29: #{tpu_custom_call.1} parent=5 // pred_check
        _
      $region30: #{tpu_custom_call.1} parent=5 // pred_check_branch
        %213 = sbr.rel (%p210) target = $region32
      $region31: #{tpu_custom_call.1} parent=5 // pred_region
        %s214 = ssub.s32 %s19, 1
        %s215 = sand.u32 %s46, 1
        %s216 = scalar_lea.sflag [#allocation4], %s215
        %s217 = sand.u32 %s46, 1
        %s218 = smul.addr %s217, 192
        %s219 = scalar_lea.vmem [#allocation3], %s218
        // Predicated region
        $region33: #{tpu_custom_call.1} parent=31 // pred_check
          %p220 = pneg %p59
        $region34: #{tpu_custom_call.1} parent=31 // pred_check_branch
          %222 = sbr.rel (%p220) target = $region36
        $region35: #{tpu_custom_call.1} parent=31 // pred_region
          %223 = dma.done %s216, 3072
        $region36: #{tpu_custom_call.1} parent=31 // pred_fallthru
          _
        %s224 = sand.u32 %s74, 1
        %s225 = scalar_lea.sflag [#allocation8], %s224
        %s226 = sand.u32 %s74, 1
        %s227 = smul.addr %s226, 192
        %s228 = scalar_lea.vmem [#allocation7], %s227
        // Predicated region
        $region37: #{tpu_custom_call.1} parent=31 // pred_check
          %p229 = pneg %p87
        $region38: #{tpu_custom_call.1} parent=31 // pred_check_branch
          %231 = sbr.rel (%p229) target = $region40
        $region39: #{tpu_custom_call.1} parent=31 // pred_region
          %232 = dma.done %s225, 3072
        $region40: #{tpu_custom_call.1} parent=31 // pred_fallthru
          _
        // Predicated region
        $region41: #{tpu_custom_call.1} parent=31 // pred_check
          %p233 = pneg %p108
        $region42: #{tpu_custom_call.1} parent=31 // pred_check_branch
          %235 = sbr.rel (%p233) target = $region44
        $region43: #{tpu_custom_call.1} parent=31 // pred_region
          %236 = dma.done [#allocation6], 16
        $region44: #{tpu_custom_call.1} parent=31 // pred_fallthru
          _
        %237 = sfence
        %s238 = sand.u32 %s46, 1
        %s239 = scalar_lea.sflag [#allocation4], %s238
        %s240 = sand.u32 %s46, 1
        %s241 = smul.addr %s240, 192
        %s242 = scalar_lea.vmem [#allocation3], %s241
        %p243 = pneg %p59
        %p244 = pneg %p56
        %s245 = sand.u32 %s74, 1
        %s246 = scalar_lea.sflag [#allocation8], %s245
        %s247 = sand.u32 %s74, 1
        %s248 = smul.addr %s247, 192
        %s249 = scalar_lea.vmem [#allocation7], %s248
        %p250 = pneg %p87
        %p251 = pneg %p84
        %p252 = pneg %p108
        %p253 = pneg %p105
        %p254 = pneg %p134
        %p255 = pneg %p131
        %s256 = sand.u32 %s121, 1
        %s257 = scalar_lea.sflag [#allocation5], %s256
        %s258 = sand.u32 %s121, 1
        %s259 = smul.addr %s258, 8
        %s260 = scalar_lea.vmem [#allocation10], %s259
        %s261 = sadd.s32 %s28, %s29
        %s262 = sadd.s32 %s28, %s29
        %p263 = scmp.eq.s32.totalorder %s29, 0
        // Predicated region
        $region45: #{tpu_custom_call.1} parent=31 // pred_check
          %p264 = pneg %p263
        $region46: #{tpu_custom_call.1} parent=31 // pred_check_branch
          %266 = sbr.rel (%p264) target = $region48
        $region47: #{tpu_custom_call.1} parent=31 // pred_region
          %s267 = scalar_lea.smem [#allocation2], 0
          %268 = sst [smem:[%s267]] 0.0
          %s269 = scalar_lea.smem [#allocation2], 1
          %270 = sst [smem:[%s269]] 0.0
          %s271 = scalar_lea.smem [#allocation2], 2
          %272 = sst [smem:[%s271]] 0.0
        $region48: #{tpu_custom_call.1} parent=31 // pred_fallthru
          _
        %v273 = vld [vmem:[%s219] sm:$0xff]
        %v274 = vld [vmem:[%s219 + $0x8] sm:$0xff]
        %v275 = vld [vmem:[%s219 + $0x10] sm:$0xff]
        %v276 = vld [vmem:[%s219 + $0x18] sm:$0xff]
        %v277 = vld [vmem:[%s219 + $0x20] sm:$0xff]
        %v278 = vld [vmem:[%s219 + $0x28] sm:$0xff]
        %v279 = vld [vmem:[%s219 + $0x30] sm:$0xff]
        %v280 = vld [vmem:[%s219 + $0x38] sm:$0xff]
        %v281 = vld [vmem:[%s219 + $0x40] sm:$0xff]
        %v282 = vld [vmem:[%s219 + $0x48] sm:$0xff]
        %v283 = vld [vmem:[%s219 + $0x50] sm:$0xff]
        %v284 = vld [vmem:[%s219 + $0x58] sm:$0xff]
        %v285 = vld [vmem:[%s219 + $0x60] sm:$0xff]
        %v286 = vld [vmem:[%s219 + $0x68] sm:$0xff]
        %v287 = vld [vmem:[%s219 + $0x70] sm:$0xff]
        %v288 = vld [vmem:[%s219 + $0x78] sm:$0xff]
        %v289 = vld [vmem:[%s219 + $0x80] sm:$0xff]
        %v290 = vld [vmem:[%s219 + $0x88] sm:$0xff]
        %v291 = vld [vmem:[%s219 + $0x90] sm:$0xff]
        %v292 = vld [vmem:[%s219 + $0x98] sm:$0xff]
        %v293 = vld [vmem:[%s219 + $0xa0] sm:$0xff]
        %v294 = vld [vmem:[%s219 + $0xa8] sm:$0xff]
        %v295 = vld [vmem:[%s219 + $0xb0] sm:$0xff]
        %v296 = vld [vmem:[%s219 + $0xb8] sm:$0xff]
        %v297 = vld [vmem:[%s228] sm:$0xff]
        %v298 = vld [vmem:[%s228 + $0x8] sm:$0xff]
        %v299 = vld [vmem:[%s228 + $0x10] sm:$0xff]
        %v300 = vld [vmem:[%s228 + $0x18] sm:$0xff]
        %v301 = vld [vmem:[%s228 + $0x20] sm:$0xff]
        %v302 = vld [vmem:[%s228 + $0x28] sm:$0xff]
        %v303 = vld [vmem:[%s228 + $0x30] sm:$0xff]
        %v304 = vld [vmem:[%s228 + $0x38] sm:$0xff]
        %v305 = vld [vmem:[%s228 + $0x40] sm:$0xff]
        %v306 = vld [vmem:[%s228 + $0x48] sm:$0xff]
        %v307 = vld [vmem:[%s228 + $0x50] sm:$0xff]
        %v308 = vld [vmem:[%s228 + $0x58] sm:$0xff]
        %v309 = vld [vmem:[%s228 + $0x60] sm:$0xff]
        %v310 = vld [vmem:[%s228 + $0x68] sm:$0xff]
        %v311 = vld [vmem:[%s228 + $0x70] sm:$0xff]
        %v312 = vld [vmem:[%s228 + $0x78] sm:$0xff]
        %v313 = vld [vmem:[%s228 + $0x80] sm:$0xff]
        %v314 = vld [vmem:[%s228 + $0x88] sm:$0xff]
        %v315 = vld [vmem:[%s228 + $0x90] sm:$0xff]
        %v316 = vld [vmem:[%s228 + $0x98] sm:$0xff]
        %v317 = vld [vmem:[%s228 + $0xa0] sm:$0xff]
        %v318 = vld [vmem:[%s228 + $0xa8] sm:$0xff]
        %v319 = vld [vmem:[%s228 + $0xb0] sm:$0xff]
        %v320 = vld [vmem:[%s228 + $0xb8] sm:$0xff]
        %v321 = vand.u32 2147483647, %v273
        %v322 = vand.u32 2147483647, %v274
        %v323 = vand.u32 2147483647, %v275
        %v324 = vand.u32 2147483647, %v276
        %v325 = vand.u32 2147483647, %v277
        %v326 = vand.u32 2147483647, %v278
        %v327 = vand.u32 2147483647, %v279
        %v328 = vand.u32 2147483647, %v280
        %v329 = vand.u32 2147483647, %v281
        %v330 = vand.u32 2147483647, %v282
        %v331 = vand.u32 2147483647, %v283
        %v332 = vand.u32 2147483647, %v284
        %v333 = vand.u32 2147483647, %v285
        %v334 = vand.u32 2147483647, %v286
        %v335 = vand.u32 2147483647, %v287
        %v336 = vand.u32 2147483647, %v288
        %v337 = vand.u32 2147483647, %v289
        %v338 = vand.u32 2147483647, %v290
        %v339 = vand.u32 2147483647, %v291
        %v340 = vand.u32 2147483647, %v292
        %v341 = vand.u32 2147483647, %v293
        %v342 = vand.u32 2147483647, %v294
        %v343 = vand.u32 2147483647, %v295
        %v344 = vand.u32 2147483647, %v296
        %v345 = vsub.f32 0.0, %v321
        %v346 = vsub.f32 0.0, %v322
        %v347 = vsub.f32 0.0, %v323
        %v348 = vsub.f32 0.0, %v324
        %v349 = vsub.f32 0.0, %v325
        %v350 = vsub.f32 0.0, %v326
        %v351 = vsub.f32 0.0, %v327
        %v352 = vsub.f32 0.0, %v328
        %v353 = vsub.f32 0.0, %v329
        %v354 = vsub.f32 0.0, %v330
        %v355 = vsub.f32 0.0, %v331
        %v356 = vsub.f32 0.0, %v332
        %v357 = vsub.f32 0.0, %v333
        %v358 = vsub.f32 0.0, %v334
        %v359 = vsub.f32 0.0, %v335
        %v360 = vsub.f32 0.0, %v336
        %v361 = vsub.f32 0.0, %v337
        %v362 = vsub.f32 0.0, %v338
        %v363 = vsub.f32 0.0, %v339
        %v364 = vsub.f32 0.0, %v340
        %v365 = vsub.f32 0.0, %v341
        %v366 = vsub.f32 0.0, %v342
        %v367 = vsub.f32 0.0, %v343
        %v368 = vsub.f32 0.0, %v344
        %v369 = vmul.f32 %v345, 1.442695
        %v370 = vpow.pop %v369
        %v371 = vmul.f32 %v346, 1.442695
        %v372 = vpow.pop %v371
        %v373 = vmul.f32 %v347, 1.442695
        %v374 = vpow.pop %v373
        %v375 = vmul.f32 %v348, 1.442695
        %v376 = vpow.pop %v375
        %v377 = vmul.f32 %v349, 1.442695
        %v378 = vpow.pop %v377
        %v379 = vmul.f32 %v350, 1.442695
        %v380 = vpow.pop %v379
        %v381 = vmul.f32 %v351, 1.442695
        %v382 = vpow.pop %v381
        %v383 = vmul.f32 %v352, 1.442695
        %v384 = vpow.pop %v383
        %v385 = vmul.f32 %v353, 1.442695
        %v386 = vpow.pop %v385
        %v387 = vmul.f32 %v354, 1.442695
        %v388 = vpow.pop %v387
        %v389 = vmul.f32 %v355, 1.442695
        %v390 = vpow.pop %v389
        %v391 = vmul.f32 %v356, 1.442695
        %v392 = vpow.pop %v391
        %v393 = vmul.f32 %v357, 1.442695
        %v394 = vpow.pop %v393
        %v395 = vmul.f32 %v358, 1.442695
        %v396 = vpow.pop %v395
        %v397 = vmul.f32 %v359, 1.442695
        %v398 = vpow.pop %v397
        %v399 = vmul.f32 %v360, 1.442695
        %v400 = vpow.pop %v399
        %v401 = vmul.f32 %v361, 1.442695
        %v402 = vpow.pop %v401
        %v403 = vmul.f32 %v362, 1.442695
        %v404 = vpow.pop %v403
        %v405 = vmul.f32 %v363, 1.442695
        %v406 = vpow.pop %v405
        %v407 = vmul.f32 %v364, 1.442695
        %v408 = vpow.pop %v407
        %v409 = vmul.f32 %v365, 1.442695
        %v410 = vpow.pop %v409
        %v411 = vmul.f32 %v366, 1.442695
        %v412 = vpow.pop %v411
        %v413 = vmul.f32 %v367, 1.442695
        %v414 = vpow.pop %v413
        %v415 = vmul.f32 %v368, 1.442695
        %v416 = vpow.pop %v415
        %v417 = vmax.f32 %v273, 0.0
        %v418 = vmax.f32 %v274, 0.0
        %v419 = vmax.f32 %v275, 0.0
        %v420 = vmax.f32 %v276, 0.0
        %v421 = vmax.f32 %v277, 0.0
        %v422 = vmax.f32 %v278, 0.0
        %v423 = vmax.f32 %v279, 0.0
        %v424 = vmax.f32 %v280, 0.0
        %v425 = vmax.f32 %v281, 0.0
        %v426 = vmax.f32 %v282, 0.0
        %v427 = vmax.f32 %v283, 0.0
        %v428 = vmax.f32 %v284, 0.0
        %v429 = vmax.f32 %v285, 0.0
        %v430 = vmax.f32 %v286, 0.0
        %v431 = vmax.f32 %v287, 0.0
        %v432 = vmax.f32 %v288, 0.0
        %v433 = vmax.f32 %v289, 0.0
        %v434 = vmax.f32 %v290, 0.0
        %v435 = vmax.f32 %v291, 0.0
        %v436 = vmax.f32 %v292, 0.0
        %v437 = vmax.f32 %v293, 0.0
        %v438 = vmax.f32 %v294, 0.0
        %v439 = vmax.f32 %v295, 0.0
        %v440 = vmax.f32 %v296, 0.0
        %v441 = vmul.f32 %v273, %v297
        %v442 = vmul.f32 %v274, %v298
        %v443 = vmul.f32 %v275, %v299
        %v444 = vmul.f32 %v276, %v300
        %v445 = vmul.f32 %v277, %v301
        %v446 = vmul.f32 %v278, %v302
        %v447 = vmul.f32 %v279, %v303
        %v448 = vmul.f32 %v280, %v304
        %v449 = vmul.f32 %v281, %v305
        %v450 = vmul.f32 %v282, %v306
        %v451 = vmul.f32 %v283, %v307
        %v452 = vmul.f32 %v284, %v308
        %v453 = vmul.f32 %v285, %v309
        %v454 = vmul.f32 %v286, %v310
        %v455 = vmul.f32 %v287, %v311
        %v456 = vmul.f32 %v288, %v312
        %v457 = vmul.f32 %v289, %v313
        %v458 = vmul.f32 %v290, %v314
        %v459 = vmul.f32 %v291, %v315
        %v460 = vmul.f32 %v292, %v316
        %v461 = vmul.f32 %v293, %v317
        %v462 = vmul.f32 %v294, %v318
        %v463 = vmul.f32 %v295, %v319
        %v464 = vmul.f32 %v296, %v320
        %v465 = vsub.f32 %v417, %v441
        %v466 = vsub.f32 %v418, %v442
        %v467 = vsub.f32 %v419, %v443
        %v468 = vsub.f32 %v420, %v444
        %v469 = vsub.f32 %v421, %v445
        %v470 = vsub.f32 %v422, %v446
        %v471 = vsub.f32 %v423, %v447
        %v472 = vsub.f32 %v424, %v448
        %v473 = vsub.f32 %v425, %v449
        %v474 = vsub.f32 %v426, %v450
        %v475 = vsub.f32 %v427, %v451
        %v476 = vsub.f32 %v428, %v452
        %v477 = vsub.f32 %v429, %v453
        %v478 = vsub.f32 %v430, %v454
        %v479 = vsub.f32 %v431, %v455
        %v480 = vsub.f32 %v432, %v456
        %v481 = vsub.f32 %v433, %v457
        %v482 = vsub.f32 %v434, %v458
        %v483 = vsub.f32 %v435, %v459
        %v484 = vsub.f32 %v436, %v460
        %v485 = vsub.f32 %v437, %v461
        %v486 = vsub.f32 %v438, %v462
        %v487 = vsub.f32 %v439, %v463
        %v488 = vsub.f32 %v440, %v464
        %v489 = vadd.f32 %v370, 1.0
        %v490 = vlog2.pop %v489
        %v491 = vmul.f32 %v490, 0.6931472
        %v492 = vmul.f32 -0.5, %v370
        %v493 = vadd.f32 %v492, 1.0
        %v494 = vmul.f32 %v493, %v370
        %v495 = vand.u32 2147483647, %v370
        %vm496 = vcmp.lt.f32.partialorder %v495, 0.0004427343
        %v497 = vsel %vm496, %v494, %v491
        %v498 = vadd.f32 %v372, 1.0
        %v499 = vlog2.pop %v498
        %v500 = vmul.f32 %v499, 0.6931472
        %v501 = vmul.f32 -0.5, %v372
        %v502 = vadd.f32 %v501, 1.0
        %v503 = vmul.f32 %v502, %v372
        %v504 = vand.u32 2147483647, %v372
        %vm505 = vcmp.lt.f32.partialorder %v504, 0.0004427343
        %v506 = vsel %vm505, %v503, %v500
        %v507 = vadd.f32 %v374, 1.0
        %v508 = vlog2.pop %v507
        %v509 = vmul.f32 %v508, 0.6931472
        %v510 = vmul.f32 -0.5, %v374
        %v511 = vadd.f32 %v510, 1.0
        %v512 = vmul.f32 %v511, %v374
        %v513 = vand.u32 2147483647, %v374
        %vm514 = vcmp.lt.f32.partialorder %v513, 0.0004427343
        %v515 = vsel %vm514, %v512, %v509
        %v516 = vadd.f32 %v376, 1.0
        %v517 = vlog2.pop %v516
        %v518 = vmul.f32 %v517, 0.6931472
        %v519 = vmul.f32 -0.5, %v376
        %v520 = vadd.f32 %v519, 1.0
        %v521 = vmul.f32 %v520, %v376
        %v522 = vand.u32 2147483647, %v376
        %vm523 = vcmp.lt.f32.partialorder %v522, 0.0004427343
        %v524 = vsel %vm523, %v521, %v518
        %v525 = vadd.f32 %v378, 1.0
        %v526 = vlog2.pop %v525
        %v527 = vmul.f32 %v526, 0.6931472
        %v528 = vmul.f32 -0.5, %v378
        %v529 = vadd.f32 %v528, 1.0
        %v530 = vmul.f32 %v529, %v378
        %v531 = vand.u32 2147483647, %v378
        %vm532 = vcmp.lt.f32.partialorder %v531, 0.0004427343
        %v533 = vsel %vm532, %v530, %v527
        %v534 = vadd.f32 %v380, 1.0
        %v535 = vlog2.pop %v534
        %v536 = vmul.f32 %v535, 0.6931472
        %v537 = vmul.f32 -0.5, %v380
        %v538 = vadd.f32 %v537, 1.0
        %v539 = vmul.f32 %v538, %v380
        %v540 = vand.u32 2147483647, %v380
        %vm541 = vcmp.lt.f32.partialorder %v540, 0.0004427343
        %v542 = vsel %vm541, %v539, %v536
        %v543 = vadd.f32 %v382, 1.0
        %v544 = vlog2.pop %v543
        %v545 = vmul.f32 %v544, 0.6931472
        %v546 = vmul.f32 -0.5, %v382
        %v547 = vadd.f32 %v546, 1.0
        %v548 = vmul.f32 %v547, %v382
        %v549 = vand.u32 2147483647, %v382
        %vm550 = vcmp.lt.f32.partialorder %v549, 0.0004427343
        %v551 = vsel %vm550, %v548, %v545
        %v552 = vadd.f32 %v384, 1.0
        %v553 = vlog2.pop %v552
        %v554 = vmul.f32 %v553, 0.6931472
        %v555 = vmul.f32 -0.5, %v384
        %v556 = vadd.f32 %v555, 1.0
        %v557 = vmul.f32 %v556, %v384
        %v558 = vand.u32 2147483647, %v384
        %vm559 = vcmp.lt.f32.partialorder %v558, 0.0004427343
        %v560 = vsel %vm559, %v557, %v554
        %v561 = vadd.f32 %v386, 1.0
        %v562 = vlog2.pop %v561
        %v563 = vmul.f32 %v562, 0.6931472
        %v564 = vmul.f32 -0.5, %v386
        %v565 = vadd.f32 %v564, 1.0
        %v566 = vmul.f32 %v565, %v386
        %v567 = vand.u32 2147483647, %v386
        %vm568 = vcmp.lt.f32.partialorder %v567, 0.0004427343
        %v569 = vsel %vm568, %v566, %v563
        %v570 = vadd.f32 %v388, 1.0
        %v571 = vlog2.pop %v570
        %v572 = vmul.f32 %v571, 0.6931472
        %v573 = vmul.f32 -0.5, %v388
        %v574 = vadd.f32 %v573, 1.0
        %v575 = vmul.f32 %v574, %v388
        %v576 = vand.u32 2147483647, %v388
        %vm577 = vcmp.lt.f32.partialorder %v576, 0.0004427343
        %v578 = vsel %vm577, %v575, %v572
        %v579 = vadd.f32 %v390, 1.0
        %v580 = vlog2.pop %v579
        %v581 = vmul.f32 %v580, 0.6931472
        %v582 = vmul.f32 -0.5, %v390
        %v583 = vadd.f32 %v582, 1.0
        %v584 = vmul.f32 %v583, %v390
        %v585 = vand.u32 2147483647, %v390
        %vm586 = vcmp.lt.f32.partialorder %v585, 0.0004427343
        %v587 = vsel %vm586, %v584, %v581
        %v588 = vadd.f32 %v392, 1.0
        %v589 = vlog2.pop %v588
        %v590 = vmul.f32 %v589, 0.6931472
        %v591 = vmul.f32 -0.5, %v392
        %v592 = vadd.f32 %v591, 1.0
        %v593 = vmul.f32 %v592, %v392
        %v594 = vand.u32 2147483647, %v392
        %vm595 = vcmp.lt.f32.partialorder %v594, 0.0004427343
        %v596 = vsel %vm595, %v593, %v590
        %v597 = vadd.f32 %v394, 1.0
        %v598 = vlog2.pop %v597
        %v599 = vmul.f32 %v598, 0.6931472
        %v600 = vmul.f32 -0.5, %v394
        %v601 = vadd.f32 %v600, 1.0
        %v602 = vmul.f32 %v601, %v394
        %v603 = vand.u32 2147483647, %v394
        %vm604 = vcmp.lt.f32.partialorder %v603, 0.0004427343
        %v605 = vsel %vm604, %v602, %v599
        %v606 = vadd.f32 %v396, 1.0
        %v607 = vlog2.pop %v606
        %v608 = vmul.f32 %v607, 0.6931472
        %v609 = vmul.f32 -0.5, %v396
        %v610 = vadd.f32 %v609, 1.0
        %v611 = vmul.f32 %v610, %v396
        %v612 = vand.u32 2147483647, %v396
        %vm613 = vcmp.lt.f32.partialorder %v612, 0.0004427343
        %v614 = vsel %vm613, %v611, %v608
        %v615 = vadd.f32 %v398, 1.0
        %v616 = vlog2.pop %v615
        %v617 = vmul.f32 %v616, 0.6931472
        %v618 = vmul.f32 -0.5, %v398
        %v619 = vadd.f32 %v618, 1.0
        %v620 = vmul.f32 %v619, %v398
        %v621 = vand.u32 2147483647, %v398
        %vm622 = vcmp.lt.f32.partialorder %v621, 0.0004427343
        %v623 = vsel %vm622, %v620, %v617
        %v624 = vadd.f32 %v400, 1.0
        %v625 = vlog2.pop %v624
        %v626 = vmul.f32 %v625, 0.6931472
        %v627 = vmul.f32 -0.5, %v400
        %v628 = vadd.f32 %v627, 1.0
        %v629 = vmul.f32 %v628, %v400
        %v630 = vand.u32 2147483647, %v400
        %vm631 = vcmp.lt.f32.partialorder %v630, 0.0004427343
        %v632 = vsel %vm631, %v629, %v626
        %v633 = vadd.f32 %v402, 1.0
        %v634 = vlog2.pop %v633
        %v635 = vmul.f32 %v634, 0.6931472
        %v636 = vmul.f32 -0.5, %v402
        %v637 = vadd.f32 %v636, 1.0
        %v638 = vmul.f32 %v637, %v402
        %v639 = vand.u32 2147483647, %v402
        %vm640 = vcmp.lt.f32.partialorder %v639, 0.0004427343
        %v641 = vsel %vm640, %v638, %v635
        %v642 = vadd.f32 %v404, 1.0
        %v643 = vlog2.pop %v642
        %v644 = vmul.f32 %v643, 0.6931472
        %v645 = vmul.f32 -0.5, %v404
        %v646 = vadd.f32 %v645, 1.0
        %v647 = vmul.f32 %v646, %v404
        %v648 = vand.u32 2147483647, %v404
        %vm649 = vcmp.lt.f32.partialorder %v648, 0.0004427343
        %v650 = vsel %vm649, %v647, %v644
        %v651 = vadd.f32 %v406, 1.0
        %v652 = vlog2.pop %v651
        %v653 = vmul.f32 %v652, 0.6931472
        %v654 = vmul.f32 -0.5, %v406
        %v655 = vadd.f32 %v654, 1.0
        %v656 = vmul.f32 %v655, %v406
        %v657 = vand.u32 2147483647, %v406
        %vm658 = vcmp.lt.f32.partialorder %v657, 0.0004427343
        %v659 = vsel %vm658, %v656, %v653
        %v660 = vadd.f32 %v408, 1.0
        %v661 = vlog2.pop %v660
        %v662 = vmul.f32 %v661, 0.6931472
        %v663 = vmul.f32 -0.5, %v408
        %v664 = vadd.f32 %v663, 1.0
        %v665 = vmul.f32 %v664, %v408
        %v666 = vand.u32 2147483647, %v408
        %vm667 = vcmp.lt.f32.partialorder %v666, 0.0004427343
        %v668 = vsel %vm667, %v665, %v662
        %v669 = vadd.f32 %v410, 1.0
        %v670 = vlog2.pop %v669
        %v671 = vmul.f32 %v670, 0.6931472
        %v672 = vmul.f32 -0.5, %v410
        %v673 = vadd.f32 %v672, 1.0
        %v674 = vmul.f32 %v673, %v410
        %v675 = vand.u32 2147483647, %v410
        %vm676 = vcmp.lt.f32.partialorder %v675, 0.0004427343
        %v677 = vsel %vm676, %v674, %v671
        %v678 = vadd.f32 %v412, 1.0
        %v679 = vlog2.pop %v678
        %v680 = vmul.f32 %v679, 0.6931472
        %v681 = vmul.f32 -0.5, %v412
        %v682 = vadd.f32 %v681, 1.0
        %v683 = vmul.f32 %v682, %v412
        %v684 = vand.u32 2147483647, %v412
        %vm685 = vcmp.lt.f32.partialorder %v684, 0.0004427343
        %v686 = vsel %vm685, %v683, %v680
        %v687 = vadd.f32 %v414, 1.0
        %v688 = vlog2.pop %v687
        %v689 = vmul.f32 %v688, 0.6931472
        %v690 = vmul.f32 -0.5, %v414
        %v691 = vadd.f32 %v690, 1.0
        %v692 = vmul.f32 %v691, %v414
        %v693 = vand.u32 2147483647, %v414
        %vm694 = vcmp.lt.f32.partialorder %v693, 0.0004427343
        %v695 = vsel %vm694, %v692, %v689
        %v696 = vadd.f32 %v416, 1.0
        %v697 = vlog2.pop %v696
        %v698 = vmul.f32 %v697, 0.6931472
        %v699 = vmul.f32 -0.5, %v416
        %v700 = vadd.f32 %v699, 1.0
        %v701 = vmul.f32 %v700, %v416
        %v702 = vand.u32 2147483647, %v416
        %vm703 = vcmp.lt.f32.partialorder %v702, 0.0004427343
        %v704 = vsel %vm703, %v701, %v698
        %v705 = vadd.f32 %v465, %v497
        %v706 = vadd.f32 %v466, %v506
        %v707 = vadd.f32 %v467, %v515
        %v708 = vadd.f32 %v468, %v524
        %v709 = vadd.f32 %v469, %v533
        %v710 = vadd.f32 %v470, %v542
        %v711 = vadd.f32 %v471, %v551
        %v712 = vadd.f32 %v472, %v560
        %v713 = vadd.f32 %v473, %v569
        %v714 = vadd.f32 %v474, %v578
        %v715 = vadd.f32 %v475, %v587
        %v716 = vadd.f32 %v476, %v596
        %v717 = vadd.f32 %v477, %v605
        %v718 = vadd.f32 %v478, %v614
        %v719 = vadd.f32 %v479, %v623
        %v720 = vadd.f32 %v480, %v632
        %v721 = vadd.f32 %v481, %v641
        %v722 = vadd.f32 %v482, %v650
        %v723 = vadd.f32 %v483, %v659
        %v724 = vadd.f32 %v484, %v668
        %v725 = vadd.f32 %v485, %v677
        %v726 = vadd.f32 %v486, %v686
        %v727 = vadd.f32 %v487, %v695
        %v728 = vadd.f32 %v488, %v704
        %v729 = vsub.f32 0.0, %v705
        %v730 = vsub.f32 0.0, %v706
        %v731 = vsub.f32 0.0, %v707
        %v732 = vsub.f32 0.0, %v708
        %v733 = vsub.f32 0.0, %v709
        %v734 = vsub.f32 0.0, %v710
        %v735 = vsub.f32 0.0, %v711
        %v736 = vsub.f32 0.0, %v712
        %v737 = vsub.f32 0.0, %v713
        %v738 = vsub.f32 0.0, %v714
        %v739 = vsub.f32 0.0, %v715
        %v740 = vsub.f32 0.0, %v716
        %v741 = vsub.f32 0.0, %v717
        %v742 = vsub.f32 0.0, %v718
        %v743 = vsub.f32 0.0, %v719
        %v744 = vsub.f32 0.0, %v720
        %v745 = vsub.f32 0.0, %v721
        %v746 = vsub.f32 0.0, %v722
        %v747 = vsub.f32 0.0, %v723
        %v748 = vsub.f32 0.0, %v724
        %v749 = vsub.f32 0.0, %v725
        %v750 = vsub.f32 0.0, %v726
        %v751 = vsub.f32 0.0, %v727
        %v752 = vsub.f32 0.0, %v728
        %v753 = vmul.f32 %v729, 1.442695
        %v754 = vpow.pop %v753
        %v755 = vmul.f32 %v730, 1.442695
        %v756 = vpow.pop %v755
        %v757 = vmul.f32 %v731, 1.442695
        %v758 = vpow.pop %v757
        %v759 = vmul.f32 %v732, 1.442695
        %v760 = vpow.pop %v759
        %v761 = vmul.f32 %v733, 1.442695
        %v762 = vpow.pop %v761
        %v763 = vmul.f32 %v734, 1.442695
        %v764 = vpow.pop %v763
        %v765 = vmul.f32 %v735, 1.442695
        %v766 = vpow.pop %v765
        %v767 = vmul.f32 %v736, 1.442695
        %v768 = vpow.pop %v767
        %v769 = vmul.f32 %v737, 1.442695
        %v770 = vpow.pop %v769
        %v771 = vmul.f32 %v738, 1.442695
        %v772 = vpow.pop %v771
        %v773 = vmul.f32 %v739, 1.442695
        %v774 = vpow.pop %v773
        %v775 = vmul.f32 %v740, 1.442695
        %v776 = vpow.pop %v775
        %v777 = vmul.f32 %v741, 1.442695
        %v778 = vpow.pop %v777
        %v779 = vmul.f32 %v742, 1.442695
        %v780 = vpow.pop %v779
        %v781 = vmul.f32 %v743, 1.442695
        %v782 = vpow.pop %v781
        %v783 = vmul.f32 %v744, 1.442695
        %v784 = vpow.pop %v783
        %v785 = vmul.f32 %v745, 1.442695
        %v786 = vpow.pop %v785
        %v787 = vmul.f32 %v746, 1.442695
        %v788 = vpow.pop %v787
        %v789 = vmul.f32 %v747, 1.442695
        %v790 = vpow.pop %v789
        %v791 = vmul.f32 %v748, 1.442695
        %v792 = vpow.pop %v791
        %v793 = vmul.f32 %v749, 1.442695
        %v794 = vpow.pop %v793
        %v795 = vmul.f32 %v750, 1.442695
        %v796 = vpow.pop %v795
        %v797 = vmul.f32 %v751, 1.442695
        %v798 = vpow.pop %v797
        %v799 = vmul.f32 %v752, 1.442695
        %v800 = vpow.pop %v799
        %v801 = vsub.f32 1.0, %v754
        %v802 = vsub.f32 1.0, %v756
        %v803 = vsub.f32 1.0, %v758
        %v804 = vsub.f32 1.0, %v760
        %v805 = vsub.f32 1.0, %v762
        %v806 = vsub.f32 1.0, %v764
        %v807 = vsub.f32 1.0, %v766
        %v808 = vsub.f32 1.0, %v768
        %v809 = vsub.f32 1.0, %v770
        %v810 = vsub.f32 1.0, %v772
        %v811 = vsub.f32 1.0, %v774
        %v812 = vsub.f32 1.0, %v776
        %v813 = vsub.f32 1.0, %v778
        %v814 = vsub.f32 1.0, %v780
        %v815 = vsub.f32 1.0, %v782
        %v816 = vsub.f32 1.0, %v784
        %v817 = vsub.f32 1.0, %v786
        %v818 = vsub.f32 1.0, %v788
        %v819 = vsub.f32 1.0, %v790
        %v820 = vsub.f32 1.0, %v792
        %v821 = vsub.f32 1.0, %v794
        %v822 = vsub.f32 1.0, %v796
        %v823 = vsub.f32 1.0, %v798
        %v824 = vsub.f32 1.0, %v800
        %v825 = vmul.f32 %v801, %v801
        %v826 = vmul.f32 %v802, %v802
        %v827 = vmul.f32 %v803, %v803
        %v828 = vmul.f32 %v804, %v804
        %v829 = vmul.f32 %v805, %v805
        %v830 = vmul.f32 %v806, %v806
        %v831 = vmul.f32 %v807, %v807
        %v832 = vmul.f32 %v808, %v808
        %v833 = vmul.f32 %v809, %v809
        %v834 = vmul.f32 %v810, %v810
        %v835 = vmul.f32 %v811, %v811
        %v836 = vmul.f32 %v812, %v812
        %v837 = vmul.f32 %v813, %v813
        %v838 = vmul.f32 %v814, %v814
        %v839 = vmul.f32 %v815, %v815
        %v840 = vmul.f32 %v816, %v816
        %v841 = vmul.f32 %v817, %v817
        %v842 = vmul.f32 %v818, %v818
        %v843 = vmul.f32 %v819, %v819
        %v844 = vmul.f32 %v820, %v820
        %v845 = vmul.f32 %v821, %v821
        %v846 = vmul.f32 %v822, %v822
        %v847 = vmul.f32 %v823, %v823
        %v848 = vmul.f32 %v824, %v824
        %v849 = vmul.f32 %v825, %v705
        %v850 = vmul.f32 %v826, %v706
        %v851 = vmul.f32 %v827, %v707
        %v852 = vmul.f32 %v828, %v708
        %v853 = vmul.f32 %v829, %v709
        %v854 = vmul.f32 %v830, %v710
        %v855 = vmul.f32 %v831, %v711
        %v856 = vmul.f32 %v832, %v712
        %v857 = vmul.f32 %v833, %v713
        %v858 = vmul.f32 %v834, %v714
        %v859 = vmul.f32 %v835, %v715
        %v860 = vmul.f32 %v836, %v716
        %v861 = vmul.f32 %v837, %v717
        %v862 = vmul.f32 %v838, %v718
        %v863 = vmul.f32 %v839, %v719
        %v864 = vmul.f32 %v840, %v720
        %v865 = vmul.f32 %v841, %v721
        %v866 = vmul.f32 %v842, %v722
        %v867 = vmul.f32 %v843, %v723
        %v868 = vmul.f32 %v844, %v724
        %v869 = vmul.f32 %v845, %v725
        %v870 = vmul.f32 %v846, %v726
        %v871 = vmul.f32 %v847, %v727
        %v872 = vmul.f32 %v848, %v728
        %s873 = sld [smem:[#allocation2]]
        %v874 = vadd.f32 %v849, %v850
        %v875 = vadd.f32 %v874, %v851
        %v876 = vadd.f32 %v875, %v852
        %v877 = vadd.f32 %v876, %v853
        %v878 = vadd.f32 %v877, %v854
        %v879 = vadd.f32 %v878, %v855
        %v880 = vadd.f32 %v879, %v856
        %881 = vadd.xlane.f32.xlu0 %v880
        %v882 = vpop.xlane.xlu0 %881
        %v883 = vrot.slane %v882, 4
        %v884 = vadd.f32 %v882, %v883
        %v885 = vrot.slane %v884, 2
        %v886 = vadd.f32 %v884, %v885
        %v887 = vrot.slane %v886, 1
        %v888 = vadd.f32 %v886, %v887
        %s889 = vtos %v888
        %s890 = sadd.f32 %s873, %s889
        %s891 = scalar_lea.smem [#allocation2], 0
        %892 = sst [smem:[%s891]] %s890
        %s893 = sld [smem:[#allocation2 + $0x1]]
        %v894 = vadd.f32 %v857, %v858
        %v895 = vadd.f32 %v894, %v859
        %v896 = vadd.f32 %v895, %v860
        %v897 = vadd.f32 %v896, %v861
        %v898 = vadd.f32 %v897, %v862
        %v899 = vadd.f32 %v898, %v863
        %v900 = vadd.f32 %v899, %v864
        %901 = vadd.xlane.f32.xlu0 %v900
        %v902 = vpop.xlane.xlu0 %901
        %v903 = vrot.slane %v902, 4
        %v904 = vadd.f32 %v902, %v903
        %v905 = vrot.slane %v904, 2
        %v906 = vadd.f32 %v904, %v905
        %v907 = vrot.slane %v906, 1
        %v908 = vadd.f32 %v906, %v907
        %s909 = vtos %v908
        %s910 = sadd.f32 %s893, %s909
        %s911 = scalar_lea.smem [#allocation2], 1
        %912 = sst [smem:[%s911]] %s910
        %s913 = sld [smem:[#allocation2 + $0x2]]
        %v914 = vadd.f32 %v865, %v866
        %v915 = vadd.f32 %v914, %v867
        %v916 = vadd.f32 %v915, %v868
        %v917 = vadd.f32 %v916, %v869
        %v918 = vadd.f32 %v917, %v870
        %v919 = vadd.f32 %v918, %v871
        %v920 = vadd.f32 %v919, %v872
        %921 = vadd.xlane.f32.xlu0 %v920
        %v922 = vpop.xlane.xlu0 %921
        %v923 = vrot.slane %v922, 4
        %v924 = vadd.f32 %v922, %v923
        %v925 = vrot.slane %v924, 2
        %v926 = vadd.f32 %v924, %v925
        %v927 = vrot.slane %v926, 1
        %v928 = vadd.f32 %v926, %v927
        %s929 = vtos %v928
        %s930 = sadd.f32 %s913, %s929
        %s931 = scalar_lea.smem [#allocation2], 2
        %932 = sst [smem:[%s931]] %s930
        // Predicated region
        $region49: #{tpu_custom_call.1} parent=31 // pred_check
          %p933 = pneg %p263
        $region50: #{tpu_custom_call.1} parent=31 // pred_check_branch
          %935 = sbr.rel (%p933) target = $region52
        $region51: #{tpu_custom_call.1} parent=31 // pred_region
          %s936 = sld [smem:[#allocation9]]
          %s937 = sld [smem:[#allocation2]]
          %s938 = smul.f32 %s936, %s937
          %s939 = sadd.f32 %s938, 0.0
          %s940 = sld [smem:[#allocation9 + $0x1]]
          %s941 = sld [smem:[#allocation2 + $0x1]]
          %s942 = smul.f32 %s940, %s941
          %s943 = sadd.f32 %s939, %s942
          %s944 = sld [smem:[#allocation9 + $0x2]]
          %s945 = sld [smem:[#allocation2 + $0x2]]
          %s946 = smul.f32 %s944, %s945
          %s947 = sadd.f32 %s943, %s946
          %s948 = smul.f32 %s947, 0.010416667
          %v949 = vstv %s948
          %950 = vst [vmem:[%s260] sm:$0xff] %v949
        $region52: #{tpu_custom_call.1} parent=31 // pred_fallthru
          _
        %s951 = sand.u32 %s121, 1
        %s952 = scalar_lea.sflag [#allocation5], %s951
        %s953 = sand.u32 %s121, 1
        %s954 = smul.addr %s953, 8
        %s955 = scalar_lea.vmem [#allocation10], %s954
        // Predicated region
        $region53: #{tpu_custom_call.1} parent=31 // pred_check
          %p956 = pneg %p131
        $region54: #{tpu_custom_call.1} parent=31 // pred_check_branch
          %958 = sbr.rel (%p956) target = $region56
        $region55: #{tpu_custom_call.1} parent=31 // pred_region
          %s960 = ssub.s32 128, 128
          %961 = vsyncadd %s952, %s960
          %s962 = smul.addr %s28, 128
          %s963 = scalar_lea.hbm %s3, %s962
          %s965 = sshll.u32 %s955, 4
          %s966 = int_to_ptr.vmem [resolvable:$true] %s965
          %968 = dma.vmem_to_hbm [thread:$0]  %s966, 128, %s963, %s952
        $region56: #{tpu_custom_call.1} parent=31 // pred_fallthru
          _
      $region32: #{tpu_custom_call.1} parent=5 // pred_fallthru
        _
      %p969 = scmp.le.s32.totalorder 2, %s19
      // Predicated region
      $region57: #{tpu_custom_call.1} parent=5 // pred_check
        %p970 = pneg %p969
      $region58: #{tpu_custom_call.1} parent=5 // pred_check_branch
        %972 = sbr.rel (%p970) target = $region60
      $region59: #{tpu_custom_call.1} parent=5 // pred_region
        %s973 = ssub.s32 %s19, 2
        // Predicated region
        $region61: #{tpu_custom_call.1} parent=59 // pred_check
          %p974 = pneg %p137
        $region62: #{tpu_custom_call.1} parent=59 // pred_check_branch
          %976 = sbr.rel (%p974) target = $region64
        $region63: #{tpu_custom_call.1} parent=59 // pred_region
          %s977 = sand.u32 %s122, 1
          %s978 = scalar_lea.sflag [#allocation5], %s977
          %s979 = sand.u32 %s122, 1
          %s980 = smul.addr %s979, 8
          %s981 = scalar_lea.vmem [#allocation10], %s980
          %982 = dma.done %s978, 128
        $region64: #{tpu_custom_call.1} parent=59 // pred_fallthru
          _
      $region60: #{tpu_custom_call.1} parent=5 // pred_fallthru
        _
    $region6: #{tpu_custom_call.1} parent=1 // loop_footer
      %s23 = sadd.s32 1, %s19
    $region7: #{tpu_custom_call.1} parent=1 // loop_footer_branch
      %18 = sbr.rel target = $region3
    $region8: #{tpu_custom_call.1} parent=1 // loop_exit
      _
    %983 = vsyncpa [#allocation4], 1
    %s984 = scalar_lea.sflag [#allocation4], 1
    %985 = vsyncpa %s984, 1
    %986 = vsyncpa [#allocation8], 1
    %s987 = scalar_lea.sflag [#allocation8], 1
    %988 = vsyncpa %s987, 1
    %989 = vsyncpa [#allocation5], 1
    %s990 = scalar_lea.sflag [#allocation5], 1
    %991 = vsyncpa %s990, 1
    %992 = vsyncpa [#allocation6], 1
    %s993 = scalar_lea.sflag [#allocation6], 1
    %994 = vsyncpa %s993, 1

</llo_original>
